<compile_context>
chip_gen: v5e
topology: v5e:2x2
jax: 0.10.0
libtpu: 0.0.40
codegen_flags: <defaults>
</compile_context>

<pallas_src>
import jax
import jax.numpy as jnp
from jax.experimental import pallas as pl
from jax.experimental.pallas import tpu as pltpu


def _round_up(n: int, m: int) -> int:
    return ((n + m - 1) // m) * m


def mlp_kernel(x_ref, w1_ref, b1_ref, w2_ref, b2_ref, o_ref):
    # Layer 1: (TM, indim) bf16 @ (indim, hidden_p) bf16 -> f32 on the MXU.
    h = jnp.dot(x_ref[...], w1_ref[...], preferred_element_type=jnp.float32)
    # f32 epilogue on the VPU (bias broadcast + ReLU); padded lanes stay 0.
    h = jnp.maximum(h + b1_ref[...], 0.0)
    # Layer 2: only the LHS needs a cast (weights already bf16), f32 accumulate.
    o = jnp.dot(h.astype(jnp.bfloat16), w2_ref[...],
                preferred_element_type=jnp.float32)
    o_ref[...] = (o + b2_ref[...]).astype(o_ref.dtype)


def single_layer_mlp(x, w1, b1, w2, b2, *, tm=None, allow_small_fastpath=False):
    """x: (B, indim); w1: (hidden, indim); b1: (hidden,);
       w2: (outdim, hidden); b2: (outdim,)  — PyTorch nn.Linear conventions."""
    B, indim = x.shape
    hidden = w1.shape[0]
    outdim = w2.shape[0]
    out_dtype = jnp.float32

    # Optional fast path: for tiny problems, padding + launch overhead dominates
    # and XLA's fused dot wins.  Opt-in so tests still exercise the Pallas path.
    if allow_small_fastpath and B <= 256 and hidden <= 256 and outdim <= 256:
        h = jnp.maximum(x @ w1.T + b1, 0.0)
        return (h @ w2.T + b2).astype(out_dtype)

    # ---- Lane-dense padding of hidden / outdim to multiples of 128 --------------
    hidden_p = _round_up(hidden, 128)
    outdim_p = _round_up(outdim, 128)

    # One-time wrapper-side transpose + pad + bf16 cast (constant-folded for
    # static weights) -> no per-grid-step transposes inside the kernel.
    w1_t = jnp.pad(w1.T, ((0, 0), (0, hidden_p - hidden))).astype(jnp.bfloat16)
    w2_t = jnp.pad(w2.T, ((0, hidden_p - hidden),
                          (0, outdim_p - outdim))).astype(jnp.bfloat16)
    b1_p = jnp.pad(b1, (0, hidden_p - hidden)).reshape(1, hidden_p).astype(jnp.float32)
    b2_p = jnp.pad(b2, (0, outdim_p - outdim)).reshape(1, outdim_p).astype(jnp.float32)

    # ---- Batch tile selection: balanced tiles, >=2 tiles for megacore -----------
    if tm is None:
        n_tiles = pl.cdiv(B, 512)
        if B > 16:                      # only split when two real tiles exist
            n_tiles = max(n_tiles, 2)   # v7x: 2 TensorCores share the parallel axis
        tm = _round_up(pl.cdiv(B, n_tiles), 16)   # 16-row granularity (bf16 packing)
    tm = max(16, _round_up(tm, 16))

    # ---- Generation-aware VMEM budget -------------------------------------------
    try:
        vmem_cap = int(pltpu.get_tpu_info().vmem_capacity_bytes)
    except Exception:  # pragma: no cover - conservative fallback
        vmem_cap = 64 * 1024 * 1024
    budget = int(0.85 * vmem_cap)

    BF16, F32 = 2, 4

    def _vmem_need(tm_):
        return (
            2 * tm_ * indim * BF16            # streamed x tiles (double-buffered)
            + 2 * tm_ * outdim_p * F32        # streamed out tiles (double-buffered)
            + 2 * indim * hidden_p * BF16     # W1 (default double-buffering counted)
            + 2 * hidden_p * outdim_p * BF16  # W2
            + 2 * (hidden_p + outdim_p) * F32 # biases
            + tm_ * hidden_p * F32            # intermediate h
            + tm_ * outdim_p * F32            # o before store
        )

    # Shrink tm until the working set fits the budget (don't rely on min() clamp).
    while tm > 16 and _vmem_need(tm) > budget:
        tm = max(16, _round_up(tm // 2, 16))
    # TODO(synk): if the resident weights alone exceed the budget (very large
    #             hidden on v7x's 64 MiB VMEM), a hidden-axis reduction grid with
    #             an f32 accumulator would be needed; not required at these sizes.
    vmem_limit = min(budget, _vmem_need(tm) + (4 << 20))

    num_tiles = pl.cdiv(B, tm)
    B_p = num_tiles * tm
    x_p = x if B_p == B else jnp.pad(x, ((0, B_p - B), (0, 0)))
    x_p = x_p.astype(jnp.bfloat16)   # halve streamed HBM bytes; MXU-native operand

    vmem = pltpu.MemorySpace.VMEM
    out = pl.pallas_call(
        mlp_kernel,
        out_shape=jax.ShapeDtypeStruct((B_p, outdim_p), out_dtype),
        grid=(num_tiles,),
        in_specs=[
            pl.BlockSpec((tm, indim), lambda i: (i, 0), memory_space=vmem),
            pl.BlockSpec((indim, hidden_p), lambda i: (0, 0), memory_space=vmem),
            pl.BlockSpec((1, hidden_p), lambda i: (0, 0), memory_space=vmem),
            pl.BlockSpec((hidden_p, outdim_p), lambda i: (0, 0), memory_space=vmem),
            pl.BlockSpec((1, outdim_p), lambda i: (0, 0), memory_space=vmem),
        ],
        out_specs=pl.BlockSpec((tm, outdim_p), lambda i: (i, 0), memory_space=vmem),
        compiler_params=pltpu.CompilerParams(
            dimension_semantics=("parallel",),
            vmem_limit_bytes=vmem_limit,
        ),
    )(x_p, w1_t, b1_p, w2_t, b2_p)

    # Strip batch / lane padding only when it isn't a no-op (avoids an extra
    # HBM read+write of the output in the already-aligned case).
    if B_p != B or outdim_p != outdim:
        out = out[:B, :outdim]
    return out


def _torch_linear_init(key, out_features, in_features, dtype=jnp.float32):
    """Deterministic init mimicking torch.nn.Linear defaults: U(-1/sqrt(fan_in), +)."""
    kw, kb = jax.random.split(key)
    bound = 1.0 / jnp.sqrt(jnp.asarray(in_features, dtype))
    w = jax.random.uniform(kw, (out_features, in_features), dtype, -bound, bound)
    b = jax.random.uniform(kb, (out_features,), dtype, -bound, bound)
    return w, b


if __name__ == "__main__":
    # Small shapes consistent with the module: x is (batch, indim).
    batch, indim, hidden_dim, outdim = 8, 16, 32, 8

    key = jax.random.PRNGKey(0)
    kx, k1, k2 = jax.random.split(key, 3)

    x = jax.random.normal(kx, (batch, indim), jnp.float32)
    w1, b1 = _torch_linear_init(k1, hidden_dim, indim)     # first_layer
    w2, b2 = _torch_linear_init(k2, outdim, hidden_dim)    # hidden_layer

    out = single_layer_mlp(x, w1, b1, w2, b2)
    out = jax.block_until_ready(out)

    # Pure-JAX f32 reference; kernel uses bf16 MXU operands with f32 accumulate,
    # so the tolerance is bf16-scale.
    ref = jnp.maximum(x @ w1.T + b1, 0.0) @ w2.T + b2
    assert out.shape == (batch, outdim)
    assert jnp.allclose(out, ref, atol=5e-2, rtol=5e-2), "mismatch vs reference"

    print("KERNEL_OK")
</pallas_src>

<mosaic_0001>
module attributes {stable_mosaic.version = 11 : i64} {
  func.func @mlp_kernel(%arg0: i32, %arg1: memref<16x16xbf16, #tpu.memory_space<vmem>>, %arg2: memref<16x128xbf16, #tpu.memory_space<vmem>>, %arg3: memref<1x128xf32, #tpu.memory_space<vmem>>, %arg4: memref<128x128xbf16, #tpu.memory_space<vmem>>, %arg5: memref<1x128xf32, #tpu.memory_space<vmem>>, %arg6: memref<16x128xf32, #tpu.memory_space<vmem>>) attributes {dimension_semantics = [#tpu.dimension_semantics<parallel>], iteration_bounds = array<i64: 1>, scalar_prefetch = 0 : i64, scratch_operands = 0 : i64, tpu.core_type = #tpu.core_type<tc>, window_params = [{transform_indices = @transform_0, window_bounds = array<i64: 16, 16>}, {pipeline_mode = #tpu.pipeline_mode<synchronous>, transform_indices = @transform_1, window_bounds = array<i64: 16, 128>}, {pipeline_mode = #tpu.pipeline_mode<synchronous>, transform_indices = @transform_2, window_bounds = array<i64: 1, 128>}, {pipeline_mode = #tpu.pipeline_mode<synchronous>, transform_indices = @transform_3, window_bounds = array<i64: 128, 128>}, {pipeline_mode = #tpu.pipeline_mode<synchronous>, transform_indices = @transform_4, window_bounds = array<i64: 1, 128>}, {transform_indices = @transform_5, window_bounds = array<i64: 16, 128>}]} {
    %c0 = arith.constant 0 : index
    %c0_0 = arith.constant 0 : index
    %0 = vector.load %arg1[%c0, %c0_0] : memref<16x16xbf16, #tpu.memory_space<vmem>>, vector<16x16xbf16>
    %c0_1 = arith.constant 0 : index
    %c0_2 = arith.constant 0 : index
    %1 = vector.load %arg2[%c0_1, %c0_2] : memref<16x128xbf16, #tpu.memory_space<vmem>>, vector<16x128xbf16>
    %cst = arith.constant dense<0.000000e+00> : vector<16x128xf32>
    %2 = tpu.matmul %0, %1, %cst {dimension_numbers = #tpu.dot_dimension_numbers<[1], [0], [0], [1], [0, 0, 1, 1], [], []>} : vector<16x16xbf16>, vector<16x128xbf16>, vector<16x128xf32> -> vector<16x128xf32>
    %c0_3 = arith.constant 0 : index
    %c0_4 = arith.constant 0 : index
    %3 = vector.load %arg3[%c0_3, %c0_4] : memref<1x128xf32, #tpu.memory_space<vmem>>, vector<1x128xf32>
    %4 = vector.broadcast %3 : vector<1x128xf32> to vector<16x128xf32>
    %5 = arith.addf %2, %4 : vector<16x128xf32>
    %cst_5 = arith.constant 0.000000e+00 : f32
    %6 = vector.broadcast %cst_5 : f32 to vector<16x128xf32>
    %7 = arith.maximumf %5, %6 : vector<16x128xf32>
    %8 = arith.truncf %7 : vector<16x128xf32> to vector<16x128xbf16>
    %c0_6 = arith.constant 0 : index
    %c0_7 = arith.constant 0 : index
    %9 = vector.load %arg4[%c0_6, %c0_7] : memref<128x128xbf16, #tpu.memory_space<vmem>>, vector<128x128xbf16>
    %cst_8 = arith.constant dense<0.000000e+00> : vector<16x128xf32>
    %10 = tpu.matmul %8, %9, %cst_8 {dimension_numbers = #tpu.dot_dimension_numbers<[1], [0], [0], [1], [0, 0, 1, 1], [], []>} : vector<16x128xbf16>, vector<128x128xbf16>, vector<16x128xf32> -> vector<16x128xf32>
    %c0_9 = arith.constant 0 : index
    %c0_10 = arith.constant 0 : index
    %11 = vector.load %arg5[%c0_9, %c0_10] : memref<1x128xf32, #tpu.memory_space<vmem>>, vector<1x128xf32>
    %12 = vector.broadcast %11 : vector<1x128xf32> to vector<16x128xf32>
    %13 = arith.addf %10, %12 : vector<16x128xf32>
    %c0_11 = arith.constant 0 : index
    %c0_12 = arith.constant 0 : index
    %14 = vector.load %arg6[%c0_11, %c0_12] : memref<16x128xf32, #tpu.memory_space<vmem>>, vector<16x128xf32>
    tpu.vector_store %arg6[%c0_11, %c0_12], %13 {strides = array<i32>} : memref<16x128xf32, #tpu.memory_space<vmem>>, vector<16x128xf32>,
    return
  }
  func.func @transform_0(%arg0: i32) -> (i32, i32) {
    %c0_i32 = arith.constant 0 : i32
    %c0_i32_0 = arith.constant 0 : i32
    return %arg0, %c0_i32 : i32, i32
  }
  func.func @transform_1(%arg0: i32) -> (i32, i32) {
    %c0_i32 = arith.constant 0 : i32
    %c0_i32_0 = arith.constant 0 : i32
    %c0_i32_1 = arith.constant 0 : i32
    return %c0_i32, %c0_i32_0 : i32, i32
  }
  func.func @transform_2(%arg0: i32) -> (i32, i32) {
    %c0_i32 = arith.constant 0 : i32
    %c0_i32_0 = arith.constant 0 : i32
    %c0_i32_1 = arith.constant 0 : i32
    return %c0_i32, %c0_i32_0 : i32, i32
  }
  func.func @transform_3(%arg0: i32) -> (i32, i32) {
    %c0_i32 = arith.constant 0 : i32
    %c0_i32_0 = arith.constant 0 : i32
    %c0_i32_1 = arith.constant 0 : i32
    return %c0_i32, %c0_i32_0 : i32, i32
  }
  func.func @transform_4(%arg0: i32) -> (i32, i32) {
    %c0_i32 = arith.constant 0 : i32
    %c0_i32_0 = arith.constant 0 : i32
    %c0_i32_1 = arith.constant 0 : i32
    return %c0_i32, %c0_i32_0 : i32, i32
  }
  func.func @transform_5(%arg0: i32) -> (i32, i32) {
    %c0_i32 = arith.constant 0 : i32
    %c0_i32_0 = arith.constant 0 : i32
    return %arg0, %c0_i32 : i32, i32
  }
}

</mosaic_0001>

<llo_original>
// kernel: tpu_custom_call.1
$region0: #{tpu_custom_call.1}
  #allocation0 [shape = 'u32[]', space=smem, size = 0x4, offset = 0x4, fixed_abs, tag = 'smem constant byte address 0x4 - core index']
  #allocation1 [shape = 'u32[72,128]{1,0:T(1,128)}', space=vmem, size = 0x9000, scoped, tag = 'internal scratch']
  %s0 = inlined_call_operand.hbm [shape: bf16[16,16], index: 0, kind: input, shape index: {}]
  %s1 = inlined_call_operand.hbm [shape: bf16[16,128], index: 1, kind: input, shape index: {}]
  %s2 = inlined_call_operand.vmem [shape: f32[1,128], index: 2, kind: input, shape index: {}]
  %s3 = inlined_call_operand.hbm [shape: bf16[128,128], index: 3, kind: input, shape index: {}]
  %s4 = inlined_call_operand.vmem [shape: f32[1,128], index: 4, kind: input, shape index: {}]
  %s5 = inlined_call_operand.hbm [shape: f32[16,128], index: 5, kind: output, shape index: {}]
  %s6 = sld [smem:[#allocation0]]
  $region42: #{tpu_custom_call.1} parent=0
    _
  %s8 = ssub.s32 1, %s6
  %s9 = scalar_select 0, %s8, %s6
  $region1: #{tpu_custom_call.1} parent=0
    #allocation2 [shape = 'u8[4096]{0}', space=vmem, size = 0x1000, scoped, tag = 'input window, operand 0, single buffered']
    #allocation3 [shape = 's32[1]{0}', space=sflag, size = 0x4, scoped, tag = 'scoped memory for tpu_custom_call.1']
    #allocation4 [shape = 's32[1]{0}', space=sflag, size = 0x4, scoped, tag = 'scoped memory for tpu_custom_call.1']
    #allocation5 [shape = 'u8[4096]{0}', space=vmem, size = 0x1000, scoped, tag = 'input window, operand 1, single buffered']
    #allocation6 [shape = 's32[1]{0}', space=sflag, size = 0x4, scoped, tag = 'scoped memory for tpu_custom_call.1']
    #allocation7 [shape = 'u8[32768]{0}', space=vmem, size = 0x8000, scoped, tag = 'input window, operand 3, single buffered']
    #allocation8 [shape = 'u8[8192]{0}', space=vmem, size = 0x2000, scoped, tag = 'output window, operand 0, single buffered']
    %10 = vsyncpa [#allocation3], 0
    %11 = vsyncpa [#allocation6], 0
    %12 = vsyncpa [#allocation4], 0
    // Predicated region
    $region2: #{tpu_custom_call.1} parent=1 // pred_check
      _
    $region3: #{tpu_custom_call.1} parent=1 // pred_check_branch
      %14 = sbr.rel (0) target = $region5
    $region4: #{tpu_custom_call.1} parent=1 // pred_region
      %16 = vsyncadd [#allocation3], 0
      %s17 = sshll.u32 %s0, 4
      %s18 = int_to_ptr.hbm [resolvable:$true] %s17
      %s19 = sshll.u32 [#allocation2], 4
      %s20 = int_to_ptr.vmem [resolvable:$true] %s19
      %25 = dma.hbm_to_vmem [thread:$0]  %s18, 128, %s20, [#allocation3], 64, 64, 4
    $region5: #{tpu_custom_call.1} parent=1 // pred_fallthru
      _
    // Predicated region
    $region6: #{tpu_custom_call.1} parent=1 // pred_check
      _
    $region7: #{tpu_custom_call.1} parent=1 // pred_check_branch
      %27 = sbr.rel (0) target = $region9
    $region8: #{tpu_custom_call.1} parent=1 // pred_region
      %29 = vsyncadd [#allocation6], 0
      %s30 = sshll.u32 %s1, 4
      %s31 = int_to_ptr.hbm [resolvable:$true] %s30
      %s32 = sshll.u32 [#allocation5], 4
      %s33 = int_to_ptr.vmem [resolvable:$true] %s32
      %38 = dma.hbm_to_vmem [thread:$0]  %s31, 128, %s33, [#allocation6], 64, 64, 4
    $region9: #{tpu_custom_call.1} parent=1 // pred_fallthru
      _
    // Predicated region
    $region10: #{tpu_custom_call.1} parent=1 // pred_check
      _
    $region11: #{tpu_custom_call.1} parent=1 // pred_check_branch
      %40 = sbr.rel (0) target = $region13
    $region12: #{tpu_custom_call.1} parent=1 // pred_region
      _
    $region13: #{tpu_custom_call.1} parent=1 // pred_fallthru
      _
    // Predicated region
    $region14: #{tpu_custom_call.1} parent=1 // pred_check
      _
    $region15: #{tpu_custom_call.1} parent=1 // pred_check_branch
      %42 = sbr.rel (0) target = $region17
    $region16: #{tpu_custom_call.1} parent=1 // pred_region
      %44 = vsyncadd [#allocation6], 0
      %s45 = sshll.u32 %s3, 4
      %s46 = int_to_ptr.hbm [resolvable:$true] %s45
      %s47 = sshll.u32 [#allocation7], 4
      %s48 = int_to_ptr.vmem [resolvable:$true] %s47
      %53 = dma.hbm_to_vmem [thread:$0]  %s46, 1024, %s48, [#allocation6], 64, 64, 4
    $region17: #{tpu_custom_call.1} parent=1 // pred_fallthru
      _
    // Predicated region
    $region18: #{tpu_custom_call.1} parent=1 // pred_check
      _
    $region19: #{tpu_custom_call.1} parent=1 // pred_check_branch
      %55 = sbr.rel (0) target = $region21
    $region20: #{tpu_custom_call.1} parent=1 // pred_region
      _
    $region21: #{tpu_custom_call.1} parent=1 // pred_fallthru
      _
    // Predicated region
    $region22: #{tpu_custom_call.1} parent=1 // pred_check
      _
    $region23: #{tpu_custom_call.1} parent=1 // pred_check_branch
      %57 = sbr.rel (0) target = $region25
    $region24: #{tpu_custom_call.1} parent=1 // pred_region
      %59 = dma.done [#allocation3], 128
    $region25: #{tpu_custom_call.1} parent=1 // pred_fallthru
      _
    // Predicated region
    $region26: #{tpu_custom_call.1} parent=1 // pred_check
      _
    $region27: #{tpu_custom_call.1} parent=1 // pred_check_branch
      %61 = sbr.rel (0) target = $region29
    $region28: #{tpu_custom_call.1} parent=1 // pred_region
      %63 = dma.done [#allocation6], 128
    $region29: #{tpu_custom_call.1} parent=1 // pred_fallthru
      _
    // Predicated region
    $region30: #{tpu_custom_call.1} parent=1 // pred_check
      _
    $region31: #{tpu_custom_call.1} parent=1 // pred_check_branch
      %65 = sbr.rel (0) target = $region33
    $region32: #{tpu_custom_call.1} parent=1 // pred_region
      %67 = dma.done [#allocation6], 1024
    $region33: #{tpu_custom_call.1} parent=1 // pred_fallthru
      _
    %v69 = vld [vmem:[#allocation2] sm:$0xf]
    %v70 = vld [vmem:[#allocation2 + $0x4] sm:$0xf]
    %v71 = vld [vmem:[#allocation5] sm:$0xf]
    %v72 = vld [vmem:[#allocation5 + $0x4] sm:$0xf]
    %v73 = vld [vmem:[%s2] sm:$0x1]
    %v75 = vperm.slane %v73, 0
    %v79 = vunpack.c.l.b16 %v69
    %v80 = vunpack.c.l.b16 %v70
    %v81 = vpack.c.b16 %v80, %v79
    %v84 = vunpack.c.l.b16 %v71
    %v85 = vunpack.c.l.b16 %v72
    %v86 = vpack.c.b16 %v85, %v84
    %vm88 = vcmask 130048
    %v90 = vsel %vm88, %v81, 0
    %92 = vmatpush.bf16.msra.mxu0 0
    %93 = vmatpush.bf16.msra.mxu0 0
    %94 = vmatpush.bf16.msra.mxu0 0
    %95 = vmatpush.bf16.msra.mxu0 0
    %96 = vmatpush.bf16.msra.mxu0 0
    %97 = vmatpush.bf16.msra.mxu0 0
    %98 = vmatpush.bf16.msra.mxu0 0
    %99 = vmatpush.bf16.msra.mxu0 %v86
    %100 = vmatmul.bf16.gmra.mxu0 %v90
    %v101 = vpop.f32.mrf.mxu0
    %v102 = vadd.f32 %v75, %v101
    %v103 = vpop.f32.mrf.mxu0
    %v104 = vadd.f32 %v75, %v103
    %105 = vdwg.mxu0
    %v106 = vmax.f32 %v102, 0.0
    %v107 = vmax.f32 %v104, 0.0
    %v108 = vpack.c.bf16 %v107, %v106
    %v109 = vld [vmem:[#allocation7] sm:$0xf]
    %v110 = vld [vmem:[#allocation7 + $0x4] sm:$0xf]
    %v111 = vld [vmem:[#allocation7 + $0x8] sm:$0xf]
    %v112 = vld [vmem:[#allocation7 + $0xc] sm:$0xf]
    %v113 = vld [vmem:[#allocation7 + $0x10] sm:$0xf]
    %v114 = vld [vmem:[#allocation7 + $0x14] sm:$0xf]
    %v115 = vld [vmem:[#allocation7 + $0x18] sm:$0xf]
    %v116 = vld [vmem:[#allocation7 + $0x1c] sm:$0xf]
    %v117 = vld [vmem:[#allocation7 + $0x20] sm:$0xf]
    %v118 = vld [vmem:[#allocation7 + $0x24] sm:$0xf]
    %v119 = vld [vmem:[#allocation7 + $0x28] sm:$0xf]
    %v120 = vld [vmem:[#allocation7 + $0x2c] sm:$0xf]
    %v121 = vld [vmem:[#allocation7 + $0x30] sm:$0xf]
    %v122 = vld [vmem:[#allocation7 + $0x34] sm:$0xf]
    %v123 = vld [vmem:[#allocation7 + $0x38] sm:$0xf]
    %v124 = vld [vmem:[#allocation7 + $0x3c] sm:$0xf]
    %v125 = vld [vmem:[%s4] sm:$0x1]
    %v127 = vperm.slane %v125, 0
    %v145 = vunpack.c.l.b16 %v109
    %v146 = vunpack.c.l.b16 %v110
    %v147 = vunpack.c.l.b16 %v111
    %v148 = vunpack.c.l.b16 %v112
    %v149 = vunpack.c.l.b16 %v113
    %v150 = vunpack.c.l.b16 %v114
    %v151 = vunpack.c.l.b16 %v115
    %v152 = vunpack.c.l.b16 %v116
    %v153 = vunpack.c.l.b16 %v117
    %v154 = vunpack.c.l.b16 %v118
    %v155 = vunpack.c.l.b16 %v119
    %v156 = vunpack.c.l.b16 %v120
    %v157 = vunpack.c.l.b16 %v121
    %v158 = vunpack.c.l.b16 %v122
    %v159 = vunpack.c.l.b16 %v123
    %v160 = vunpack.c.l.b16 %v124
    %v161 = vpack.c.b16 %v146, %v145
    %v162 = vpack.c.b16 %v148, %v147
    %v163 = vpack.c.b16 %v150, %v149
    %v164 = vpack.c.b16 %v152, %v151
    %v165 = vpack.c.b16 %v154, %v153
    %v166 = vpack.c.b16 %v156, %v155
    %v167 = vpack.c.b16 %v158, %v157
    %v168 = vpack.c.b16 %v160, %v159
    %177 = vmatpush.bf16.msra.mxu0 %v168
    %178 = vmatpush.bf16.msra.mxu0 %v167
    %179 = vmatpush.bf16.msra.mxu0 %v166
    %180 = vmatpush.bf16.msra.mxu0 %v165
    %181 = vmatpush.bf16.msra.mxu0 %v164
    %182 = vmatpush.bf16.msra.mxu0 %v163
    %183 = vmatpush.bf16.msra.mxu0 %v162
    %184 = vmatpush.bf16.msra.mxu0 %v161
    %185 = vmatmul.bf16.gmra.mxu0 %v108
    %v186 = vpop.f32.mrf.mxu0
    %v187 = vadd.f32 %v127, %v186
    %v188 = vpop.f32.mrf.mxu0
    %v189 = vadd.f32 %v127, %v188
    %190 = vdwg.mxu0
    %191 = vst [vmem:[#allocation8] sm:$0xff] %v187
    %192 = vst [vmem:[#allocation8 + $0x8] sm:$0xff] %v189
    // Predicated region
    $region34: #{tpu_custom_call.1} parent=1 // pred_check
      _
    $region35: #{tpu_custom_call.1} parent=1 // pred_check_branch
      %194 = sbr.rel (0) target = $region37
    $region36: #{tpu_custom_call.1} parent=1 // pred_region
      %196 = vsyncadd [#allocation4], 0
      %s197 = sshll.u32 [#allocation8], 4
      %s198 = int_to_ptr.vmem [resolvable:$true] %s197
      %s199 = sshll.u32 %s5, 4
      %s200 = int_to_ptr.hbm [resolvable:$true] %s199
      %205 = dma.vmem_to_hbm [thread:$0]  %s198, 256, %s200, [#allocation4], 128, 128, 8
    $region37: #{tpu_custom_call.1} parent=1 // pred_fallthru
      _
    // Predicated region
    $region38: #{tpu_custom_call.1} parent=1 // pred_check
      _
    $region39: #{tpu_custom_call.1} parent=1 // pred_check_branch
      %207 = sbr.rel (0) target = $region41
    $region40: #{tpu_custom_call.1} parent=1 // pred_region
      %209 = dma.done [#allocation4], 256
    $region41: #{tpu_custom_call.1} parent=1 // pred_fallthru
      _
    %210 = vsyncpa [#allocation3], 1
    %211 = vsyncpa [#allocation6], 1
    %212 = vsyncpa [#allocation4], 1

</llo_original>
